<compile_context>
chip_gen: v7x
topology: tpu7x:2x2x1
jax: 0.10.0
libtpu: 0.0.40
codegen_flags: <defaults>
</compile_context>

<pallas_src>
import jax
import jax.numpy as jnp
from jax.experimental import pallas as pl
from jax.experimental.pallas import tpu as pltpu

BN_EPS = 1e-5
_MiB = 1024 * 1024


def _round_up(x: int, m: int) -> int:
    return ((x + m - 1) // m) * m


def _round_down(x: int, m: int) -> int:
    return (x // m) * m


def _vmem_limit_bytes() -> int:
    # Per-generation VMEM budget: ~70% of physical capacity
    # (v5e/v6e: 128 MiB -> ~90 MiB, v7x: 64 MiB -> ~45 MiB).
    try:
        cap = int(pltpu.get_tpu_info().vmem_capacity_bytes)
    except Exception:
        cap = 64 * _MiB          # v7x-safe fallback
    return max(32 * _MiB, int(cap * 0.70))


def _pick_row_tile(n: int, bytes_per_row: int, budget_bytes: int,
                   cap_rows: int = 1024) -> int:
    """Largest row tile (multiple of 8, <= n, <= cap) fitting the VMEM budget."""
    if n < 8:
        return max(n, 1)
    by_budget = max(budget_bytes // max(bytes_per_row, 1), 8)
    tm = min(int(by_budget), cap_rows, n)
    tm = max(_round_down(tm, 8), 8)
    return min(tm, _round_down(n, 8))


# ----------------------------------------------------------------------------
# Pass 1: per-tile BatchNorm partial statistics (sum, sum-of-squares).
# ----------------------------------------------------------------------------
def _make_bn_stats_kernel(n_valid: int, tm: int, sub: int, d: int):
    ragged = (n_valid % tm) != 0

    def kernel(x_ref, sum_ref, sq_ref):
        # x_ref: (tm, d) row tile (last tile may be partial / ragged).
        x = x_ref[...].astype(jnp.float32)
        if ragged:
            # Mask tail rows past the true N (where-select is NaN-safe for the
            # unspecified out-of-range rows of a partial input block).
            row = (jax.lax.broadcasted_iota(jnp.int32, (tm, 1), 0)
                   + pl.program_id(0) * tm)
            x = jnp.where(row < n_valid, x, 0.0)
        # Sublane-aligned partial: pure vreg adds, no per-tile XLU reduce.
        xr = x.reshape(tm // sub, sub, d)
        sum_ref[0] = jnp.sum(xr, axis=0)
        sq_ref[0] = jnp.sum(xr * xr, axis=0)

    return kernel


# ----------------------------------------------------------------------------
# Pass 2: tiled matmul with folded BN (out = x @ W' + b').
# ----------------------------------------------------------------------------
def _make_bn_linear_kernel(mm_dtype):
    def kernel(x_ref, w_ref, b_ref, o_ref):
        a = x_ref[...]
        if a.dtype != mm_dtype:
            a = a.astype(mm_dtype)          # optional bf16 MXU path (opt-in)
        acc = jnp.dot(a, w_ref[...], preferred_element_type=jnp.float32)
        o_ref[...] = (acc + b_ref[...]).astype(o_ref.dtype)

    return kernel


def ctc_head_forward(x, gamma, beta, fc_weight, fc_bias, *,
                     use_bf16_matmul=False, row_tile_cap=1024):
    """x: (B, S, D); fc_weight: (V, D) like torch Linear; returns (B, S, V)."""
    b, s, d = x.shape
    v = fc_weight.shape[0]
    n = b * s
    in_dtype = x.dtype
    x_item = jnp.dtype(in_dtype).itemsize

    x2 = x.reshape(n, d)                       # no HBM padding/copy of x

    vmem_limit = _vmem_limit_bytes()
    plan = int(vmem_limit * 0.8)               # headroom for compiler scratch

    # --------------------- Pass 1: partial statistics ------------------------
    tm1 = _pick_row_tile(n, 2 * d * x_item, plan, cap_rows=row_tile_cap)
    sub = 8 if tm1 % 8 == 0 else 1             # tiny-N fallback uses (1, D)
    n_tiles1 = pl.cdiv(n, tm1)

    stat_shape = jax.ShapeDtypeStruct((n_tiles1, sub, d), jnp.float32)
    sum_p, sq_p = pl.pallas_call(
        _make_bn_stats_kernel(n, tm1, sub, d),
        out_shape=(stat_shape, stat_shape),
        grid_spec=pltpu.PrefetchScalarGridSpec(
            num_scalar_prefetch=0,
            grid=(n_tiles1,),
            in_specs=[pl.BlockSpec((tm1, d), lambda i: (i, 0))],
            out_specs=(pl.BlockSpec((1, sub, d), lambda i: (i, 0, 0)),
                       pl.BlockSpec((1, sub, d), lambda i: (i, 0, 0))),
        ),
        compiler_params=pltpu.CompilerParams(
            dimension_semantics=("parallel",),   # shards rows across v7x cores
            vmem_limit_bytes=vmem_limit),
        cost_estimate=pl.CostEstimate(
            flops=3 * n * d,
            transcendentals=0,
            bytes_accessed=n * d * x_item + 2 * n_tiles1 * sub * d * 4),
    )(x2)

    # -------- Fold BN into the Linear weights/bias (tiny O(D*V) work) --------
    # NOTE: variance via E[x^2] - E[x]^2 in f32 (clamped at 0); adequate for
    # normalized activations, can lose precision for very large feature means.
    x_sum = jnp.sum(sum_p, axis=(0, 1))        # (d,)
    x_sq = jnp.sum(sq_p, axis=(0, 1))
    inv_n = 1.0 / float(n)
    mean = x_sum * inv_n
    var = jnp.maximum(x_sq * inv_n - mean * mean, 0.0)
    inv_std = jax.lax.rsqrt(var + BN_EPS)
    scale = gamma.astype(jnp.float32) * inv_std            # (d,)
    shift = beta.astype(jnp.float32) - mean * scale        # (d,)

    vp = _round_up(v, 128)                      # lane-dense padded vocab
    w_t = fc_weight.T                           # (d, v)
    fc_bias_p = fc_bias
    if vp != v:
        w_t = jnp.pad(w_t, ((0, 0), (0, vp - v)))
        fc_bias_p = jnp.pad(fc_bias, (0, vp - v))

    mm_dtype = in_dtype
    if use_bf16_matmul and in_dtype == jnp.float32:
        mm_dtype = jnp.bfloat16                 # opt-in accuracy tradeoff

    w_f32 = w_t.astype(jnp.float32)
    w_fold = (w_f32 * scale[:, None]).astype(mm_dtype)               # (d, vp)
    b_fold = (fc_bias_p.astype(jnp.float32) + shift @ w_f32).reshape(1, vp)

    mm_item = jnp.dtype(mm_dtype).itemsize
    out_item = x_item
    bytes2 = (n * d * x_item + d * vp * mm_item + n * vp * out_item + vp * 4)
    kernel2 = _make_bn_linear_kernel(mm_dtype)

    w_resident = 2 * d * vp * mm_item           # conservative (double-buffered)
    per_row_a = 2 * d * x_item + 2 * vp * out_item

    if w_resident + 128 * per_row_a <= plan:
        # Path A: folded W fully VMEM-resident; 1-D parallel row grid.
        # x and the output are streamed from/to HBM exactly once.
        tm = _pick_row_tile(n, per_row_a, plan - w_resident,
                            cap_rows=row_tile_cap)
        out2 = pl.pallas_call(
            kernel2,
            out_shape=jax.ShapeDtypeStruct((n, vp), in_dtype),
            grid_spec=pltpu.PrefetchScalarGridSpec(
                num_scalar_prefetch=0,
                grid=(pl.cdiv(n, tm),),
                in_specs=[pl.BlockSpec((tm, d), lambda i: (i, 0)),
                          pl.BlockSpec((d, vp), lambda i: (0, 0)),
                          pl.BlockSpec((1, vp), lambda i: (0, 0))],
                out_specs=pl.BlockSpec((tm, vp), lambda i: (i, 0)),
            ),
            compiler_params=pltpu.CompilerParams(
                dimension_semantics=("parallel",),
                vmem_limit_bytes=vmem_limit),
            cost_estimate=pl.CostEstimate(
                flops=2 * n * d * vp, transcendentals=0,
                bytes_accessed=bytes2),
        )(x2, w_fold, b_fold)
    else:
        # Path B: W too large to keep resident -> tile the vocab. Rows are the
        # leading *parallel* axis (megacore splits rows, not V); V is innermost
        # and "arbitrary" so the x tile stays resident across V tiles.
        tn = min(512, vp)
        while vp % tn != 0:
            tn //= 2                            # vp is a multiple of 128
        w_stream = 2 * d * tn * mm_item
        per_row_b = 2 * d * x_item + 2 * tn * out_item
        tm = _pick_row_tile(n, per_row_b, plan - w_stream,
                            cap_rows=row_tile_cap)
        out2 = pl.pallas_call(
            kernel2,
            out_shape=jax.ShapeDtypeStruct((n, vp), in_dtype),
            grid_spec=pltpu.PrefetchScalarGridSpec(
                num_scalar_prefetch=0,
                grid=(pl.cdiv(n, tm), vp // tn),
                in_specs=[pl.BlockSpec((tm, d), lambda i, j: (i, 0)),
                          pl.BlockSpec((d, tn), lambda i, j: (0, j)),
                          pl.BlockSpec((1, tn), lambda i, j: (0, j))],
                out_specs=pl.BlockSpec((tm, tn), lambda i, j: (i, j)),
            ),
            compiler_params=pltpu.CompilerParams(
                dimension_semantics=("parallel", "arbitrary"),
                vmem_limit_bytes=vmem_limit),
            cost_estimate=pl.CostEstimate(
                flops=2 * n * d * vp, transcendentals=0,
                bytes_accessed=bytes2),
        )(x2, w_fold, b_fold)

    return out2[:, :v].reshape(b, s, v)


def reference_forward(x, gamma, beta, fc_weight, fc_bias):
    """Pure-JAX reference mirroring the PyTorch forward (training-mode BN)."""
    b, s, d = x.shape
    x2 = x.reshape(b * s, d).astype(jnp.float32)
    mean = jnp.mean(x2, axis=0, keepdims=True)
    var = jnp.mean((x2 - mean) ** 2, axis=0, keepdims=True)
    x_bn = (x2 - mean) / jnp.sqrt(var + BN_EPS) * gamma + beta
    out = x_bn @ fc_weight.T.astype(jnp.float32) + fc_bias
    return out.reshape(b, s, fc_weight.shape[0])


if __name__ == "__main__":
    batch, seq, feature_dim, vocab_size = 2, 8, 32, 16

    key = jax.random.PRNGKey(0)
    kx, kw, kb, kx2 = jax.random.split(key, 4)

    # PyTorch-default-style params: BN weight=1/bias=0, Linear U(-1/sqrt(D), .).
    gamma = jnp.ones((feature_dim,), dtype=jnp.float32)
    beta = jnp.zeros((feature_dim,), dtype=jnp.float32)
    bound = 1.0 / (feature_dim ** 0.5)
    fc_weight = jax.random.uniform(kw, (vocab_size, feature_dim),
                                   minval=-bound, maxval=bound,
                                   dtype=jnp.float32)
    fc_bias = jax.random.uniform(kb, (vocab_size,),
                                 minval=-bound, maxval=bound,
                                 dtype=jnp.float32)

    forward = jax.jit(ctc_head_forward)

    # Case 1: N divisible by the row tile.
    x = jax.random.normal(kx, (batch, seq, feature_dim), dtype=jnp.float32)
    out = jax.block_until_ready(forward(x, gamma, beta, fc_weight, fc_bias))
    ref = reference_forward(x, gamma, beta, fc_weight, fc_bias)
    assert out.shape == (batch, seq, vocab_size)
    assert jnp.allclose(out, ref, atol=1e-3, rtol=1e-3), \
        float(jnp.max(jnp.abs(out - ref)))

    # Case 2: ragged N (exercises in-kernel tail masking + partial-block store).
    x_r = jax.random.normal(kx2, (3, 5, feature_dim), dtype=jnp.float32)
    out_r = jax.block_until_ready(forward(x_r, gamma, beta, fc_weight, fc_bias))
    ref_r = reference_forward(x_r, gamma, beta, fc_weight, fc_bias)
    assert out_r.shape == (3, 5, vocab_size)
    assert jnp.allclose(out_r, ref_r, atol=1e-3, rtol=1e-3), \
        float(jnp.max(jnp.abs(out_r - ref_r)))

    print("KERNEL_OK")
</pallas_src>

<mosaic_0001>
module attributes {stable_mosaic.version = 11 : i64} {
  func.func @kernel(%arg0: i32, %arg1: memref<16x32xf32, #tpu.memory_space<vmem>>, %arg2: memref<1x8x32xf32, #tpu.memory_space<vmem>>, %arg3: memref<1x8x32xf32, #tpu.memory_space<vmem>>) attributes {dimension_semantics = [#tpu.dimension_semantics<parallel>], iteration_bounds = array<i64: 1>, scalar_prefetch = 0 : i64, scratch_operands = 0 : i64, tpu.core_type = #tpu.core_type<tc>, window_params = [{transform_indices = @transform_0, window_bounds = array<i64: 16, 32>}, {transform_indices = @transform_1, window_bounds = array<i64: 1, 8, 32>}, {transform_indices = @transform_2, window_bounds = array<i64: 1, 8, 32>}]} {
    %c0 = arith.constant 0 : index
    %c0_0 = arith.constant 0 : index
    %0 = vector.load %arg1[%c0, %c0_0] : memref<16x32xf32, #tpu.memory_space<vmem>>, vector<16x32xf32>
    %1 = vector.shape_cast %0 : vector<16x32xf32> to vector<2x8x32xf32>
    %cst = arith.constant dense<0.000000e+00> : vector<8x32xf32>
    %2 = vector.multi_reduction <add>, %1, %cst [0] : vector<2x8x32xf32> to vector<8x32xf32>
    %c0_1 = arith.constant 0 : index
    %c0_2 = arith.constant 0 : index
    %c0_3 = arith.constant 0 : index
    %3 = vector.load %arg2[%c0_1, %c0_2, %c0_3] : memref<1x8x32xf32, #tpu.memory_space<vmem>>, vector<1x8x32xf32>
    %4 = vector.shape_cast %3 : vector<1x8x32xf32> to vector<8x32xf32>
    %5 = vector.shape_cast %2 : vector<8x32xf32> to vector<1x8x32xf32>
    tpu.vector_store %arg2[%c0_1, %c0_2, %c0_3], %5 {strides = array<i32>} : memref<1x8x32xf32, #tpu.memory_space<vmem>>, vector<1x8x32xf32>,
    %6 = arith.mulf %1, %1 : vector<2x8x32xf32>
    %cst_4 = arith.constant dense<0.000000e+00> : vector<8x32xf32>
    %7 = vector.multi_reduction <add>, %6, %cst_4 [0] : vector<2x8x32xf32> to vector<8x32xf32>
    %c0_5 = arith.constant 0 : index
    %c0_6 = arith.constant 0 : index
    %c0_7 = arith.constant 0 : index
    %8 = vector.load %arg3[%c0_5, %c0_6, %c0_7] : memref<1x8x32xf32, #tpu.memory_space<vmem>>, vector<1x8x32xf32>
    %9 = vector.shape_cast %8 : vector<1x8x32xf32> to vector<8x32xf32>
    %10 = vector.shape_cast %7 : vector<8x32xf32> to vector<1x8x32xf32>
    tpu.vector_store %arg3[%c0_5, %c0_6, %c0_7], %10 {strides = array<i32>} : memref<1x8x32xf32, #tpu.memory_space<vmem>>, vector<1x8x32xf32>,
    return
  }
  func.func @transform_0(%arg0: i32) -> (i32, i32) {
    %c0_i32 = arith.constant 0 : i32
    %c0_i32_0 = arith.constant 0 : i32
    return %arg0, %c0_i32 : i32, i32
  }
  func.func @transform_1(%arg0: i32) -> (i32, i32, i32) {
    %c0_i32 = arith.constant 0 : i32
    %c0_i32_0 = arith.constant 0 : i32
    %c0_i32_1 = arith.constant 0 : i32
    return %arg0, %c0_i32, %c0_i32_0 : i32, i32, i32
  }
  func.func @transform_2(%arg0: i32) -> (i32, i32, i32) {
    %c0_i32 = arith.constant 0 : i32
    %c0_i32_0 = arith.constant 0 : i32
    %c0_i32_1 = arith.constant 0 : i32
    return %arg0, %c0_i32, %c0_i32_0 : i32, i32, i32
  }
}

module attributes {stable_mosaic.version = 11 : i64} {
  func.func @kernel(%arg0: i32, %arg1: memref<16x32xf32, #tpu.memory_space<vmem>>, %arg2: memref<32x128xf32, #tpu.memory_space<vmem>>, %arg3: memref<1x128xf32, #tpu.memory_space<vmem>>, %arg4: memref<16x128xf32, #tpu.memory_space<vmem>>) attributes {dimension_semantics = [#tpu.dimension_semantics<parallel>], iteration_bounds = array<i64: 1>, scalar_prefetch = 0 : i64, scratch_operands = 0 : i64, tpu.core_type = #tpu.core_type<tc>, window_params = [{transform_indices = @transform_0, window_bounds = array<i64: 16, 32>}, {pipeline_mode = #tpu.pipeline_mode<synchronous>, transform_indices = @transform_1, window_bounds = array<i64: 32, 128>}, {pipeline_mode = #tpu.pipeline_mode<synchronous>, transform_indices = @transform_2, window_bounds = array<i64: 1, 128>}, {transform_indices = @transform_3, window_bounds = array<i64: 16, 128>}]} {
    %c0 = arith.constant 0 : index
    %c0_0 = arith.constant 0 : index
    %0 = vector.load %arg1[%c0, %c0_0] : memref<16x32xf32, #tpu.memory_space<vmem>>, vector<16x32xf32>
    %c0_1 = arith.constant 0 : index
    %c0_2 = arith.constant 0 : index
    %1 = vector.load %arg2[%c0_1, %c0_2] : memref<32x128xf32, #tpu.memory_space<vmem>>, vector<32x128xf32>
    %cst = arith.constant dense<0.000000e+00> : vector<16x128xf32>
    %2 = tpu.matmul %0, %1, %cst {dimension_numbers = #tpu.dot_dimension_numbers<[1], [0], [0], [1], [0, 0, 1, 1], [], []>} : vector<16x32xf32>, vector<32x128xf32>, vector<16x128xf32> -> vector<16x128xf32>
    %c0_3 = arith.constant 0 : index
    %c0_4 = arith.constant 0 : index
    %3 = vector.load %arg3[%c0_3, %c0_4] : memref<1x128xf32, #tpu.memory_space<vmem>>, vector<1x128xf32>
    %4 = vector.broadcast %3 : vector<1x128xf32> to vector<16x128xf32>
    %5 = arith.addf %2, %4 : vector<16x128xf32>
    %c0_5 = arith.constant 0 : index
    %c0_6 = arith.constant 0 : index
    %6 = vector.load %arg4[%c0_5, %c0_6] : memref<16x128xf32, #tpu.memory_space<vmem>>, vector<16x128xf32>
    tpu.vector_store %arg4[%c0_5, %c0_6], %5 {strides = array<i32>} : memref<16x128xf32, #tpu.memory_space<vmem>>, vector<16x128xf32>,
    return
  }
  func.func @transform_0(%arg0: i32) -> (i32, i32) {
    %c0_i32 = arith.constant 0 : i32
    %c0_i32_0 = arith.constant 0 : i32
    return %arg0, %c0_i32 : i32, i32
  }
  func.func @transform_1(%arg0: i32) -> (i32, i32) {
    %c0_i32 = arith.constant 0 : i32
    %c0_i32_0 = arith.constant 0 : i32
    %c0_i32_1 = arith.constant 0 : i32
    return %c0_i32, %c0_i32_0 : i32, i32
  }
  func.func @transform_2(%arg0: i32) -> (i32, i32) {
    %c0_i32 = arith.constant 0 : i32
    %c0_i32_0 = arith.constant 0 : i32
    %c0_i32_1 = arith.constant 0 : i32
    return %c0_i32, %c0_i32_0 : i32, i32
  }
  func.func @transform_3(%arg0: i32) -> (i32, i32) {
    %c0_i32 = arith.constant 0 : i32
    %c0_i32_0 = arith.constant 0 : i32
    return %arg0, %c0_i32 : i32, i32
  }
}

</mosaic_0001>

<llo_original>
// kernel: ctc_head_forward.2
$region0: #{ctc_head_forward.2}
  #allocation0 [shape = 'u32[]', space=smem, size = 0x4, offset = 0x4, fixed_abs, tag = 'smem constant byte address 0x4 - core index']
  #allocation1 [shape = 'u32[144,128]{1,0:T(1,128)}', space=vmem, size = 0x12000, scoped, tag = 'internal scratch']
  %s0 = inlined_call_operand.hbm [shape: f32[16,32], index: 0, kind: input, shape index: {}]
  %s1 = inlined_call_operand.vmem [shape: f32[1,8,32], index: 1, kind: output, shape index: {0}]
  %s2 = inlined_call_operand.vmem [shape: f32[1,8,32], index: 2, kind: output, shape index: {1}]
  %3 = xla_tuple %s1, %s2
  %s4 = sld [smem:[#allocation0]]
  $region26: #{ctc_head_forward.2} parent=0
    _
  %s6 = ssub.s32 1, %s4
  %s7 = scalar_select 0, %s6, %s4
  $region1: #{ctc_head_forward.2} parent=0
    #allocation2 [shape = 'u8[8192]{0}', space=vmem, size = 0x2000, scoped, tag = 'input window, operand 0, single buffered']
    #allocation3 [shape = 's32[1]{0}', space=sflag, size = 0x4, scoped, tag = 'scoped memory for ctc_head_forward.2']
    %8 = vsyncpa [#allocation3], 0
    // Predicated region
    $region2: #{ctc_head_forward.2} parent=1 // pred_check
      _
    $region3: #{ctc_head_forward.2} parent=1 // pred_check_branch
      %10 = sbr.rel (0) target = $region5
    $region4: #{ctc_head_forward.2} parent=1 // pred_region
      %s12 = ssub.s32 256, 256
      %13 = vsyncadd [#allocation3], %s12
      %s14 = sshll.u32 [#allocation2], 4
      %s15 = int_to_ptr.vmem [resolvable:$true] %s14
      %20 = dma.hbm_to_vmem [thread:$0]  %s0, 256, %s15, [#allocation3], 128, 128, 8
    $region5: #{ctc_head_forward.2} parent=1 // pred_fallthru
      _
    // Predicated region
    $region6: #{ctc_head_forward.2} parent=1 // pred_check
      _
    $region7: #{ctc_head_forward.2} parent=1 // pred_check_branch
      %22 = sbr.rel (0) target = $region9
    $region8: #{ctc_head_forward.2} parent=1 // pred_region
      %23 = dma.done [#allocation3], 256
    $region9: #{ctc_head_forward.2} parent=1 // pred_fallthru
      _
    %v24 = vld [vmem:[#allocation2] sm:$0xff]
    %v25 = vld [vmem:[#allocation2 + $0x8] sm:$0xff]
    %vm26 = vcmask 261120
    %v27 = vsel %vm26, %v24, 0.0
    %v28 = vsel %vm26, %v25, 0.0
    %v29 = vadd.f32 %v27, %v28
    %30 = vst.msk [vmem:[%s1] sm:$0xff] %vm26, %v29
    %v31 = vmul.f32 %v24, %v24
    %v32 = vmul.f32 %v25, %v25
    %v33 = vsel %vm26, %v31, 0.0
    %v34 = vsel %vm26, %v32, 0.0
    %v35 = vadd.f32 %v33, %v34
    %36 = vst.msk [vmem:[%s2] sm:$0xff] %vm26, %v35
    // Predicated region
    $region10: #{ctc_head_forward.2} parent=1 // pred_check
      _
    $region11: #{ctc_head_forward.2} parent=1 // pred_check_branch
      %38 = sbr.rel (0) target = $region13
    $region12: #{ctc_head_forward.2} parent=1 // pred_region
      _
    $region13: #{ctc_head_forward.2} parent=1 // pred_fallthru
      _
    // Predicated region
    $region14: #{ctc_head_forward.2} parent=1 // pred_check
      _
    $region15: #{ctc_head_forward.2} parent=1 // pred_check_branch
      %40 = sbr.rel (0) target = $region17
    $region16: #{ctc_head_forward.2} parent=1 // pred_region
      _
    $region17: #{ctc_head_forward.2} parent=1 // pred_fallthru
      _
    // Predicated region
    $region18: #{ctc_head_forward.2} parent=1 // pred_check
      _
    $region19: #{ctc_head_forward.2} parent=1 // pred_check_branch
      %42 = sbr.rel (0) target = $region21
    $region20: #{ctc_head_forward.2} parent=1 // pred_region
      _
    $region21: #{ctc_head_forward.2} parent=1 // pred_fallthru
      _
    // Predicated region
    $region22: #{ctc_head_forward.2} parent=1 // pred_check
      _
    $region23: #{ctc_head_forward.2} parent=1 // pred_check_branch
      %44 = sbr.rel (0) target = $region25
    $region24: #{ctc_head_forward.2} parent=1 // pred_region
      _
    $region25: #{ctc_head_forward.2} parent=1 // pred_fallthru
      _
    %45 = vsyncpa [#allocation3], 1

// kernel: ctc_head_forward.3
$region0: #{ctc_head_forward.3}
  #allocation0 [shape = 'u32[]', space=smem, size = 0x4, offset = 0x4, fixed_abs, tag = 'smem constant byte address 0x4 - core index']
  #allocation1 [shape = 'u32[144,128]{1,0:T(1,128)}', space=vmem, size = 0x12000, scoped, tag = 'internal scratch']
  %s0 = inlined_call_operand.vmem [shape: f32[16,32], index: 0, kind: input, shape index: {}]
  %s1 = inlined_call_operand.vmem [shape: f32[32,128], index: 1, kind: input, shape index: {}]
  %s2 = inlined_call_operand.vmem [shape: f32[1,128], index: 2, kind: input, shape index: {}]
  %s3 = inlined_call_operand.vmem [shape: f32[16,128], index: 3, kind: output, shape index: {}]
  %s4 = sld [smem:[#allocation0]]
  $region22: #{ctc_head_forward.3} parent=0
    _
  %s6 = ssub.s32 1, %s4
  %s7 = scalar_select 0, %s6, %s4
  // Predicated region
  $region2: #{ctc_head_forward.3} parent=0 // pred_check
    _
  $region3: #{ctc_head_forward.3} parent=0 // pred_check_branch
    %9 = sbr.rel (0) target = $region5
  $region4: #{ctc_head_forward.3} parent=0 // pred_region
    _
  $region5: #{ctc_head_forward.3} parent=0 // pred_fallthru
    _
  // Predicated region
  $region6: #{ctc_head_forward.3} parent=0 // pred_check
    _
  $region7: #{ctc_head_forward.3} parent=0 // pred_check_branch
    %11 = sbr.rel (0) target = $region9
  $region8: #{ctc_head_forward.3} parent=0 // pred_region
    _
  $region9: #{ctc_head_forward.3} parent=0 // pred_fallthru
    _
  // Predicated region
  $region10: #{ctc_head_forward.3} parent=0 // pred_check
    _
  $region11: #{ctc_head_forward.3} parent=0 // pred_check_branch
    %13 = sbr.rel (0) target = $region13
  $region12: #{ctc_head_forward.3} parent=0 // pred_region
    _
  $region13: #{ctc_head_forward.3} parent=0 // pred_fallthru
    _
  %v14 = vld [vmem:[%s0] sm:$0xff]
  %v15 = vld [vmem:[%s0 + $0x8] sm:$0xff]
  %v16 = vld [vmem:[%s1] sm:$0xff]
  %v17 = vld [vmem:[%s1 + $0x8] sm:$0xff]
  %v18 = vld [vmem:[%s1 + $0x10] sm:$0xff]
  %v19 = vld [vmem:[%s1 + $0x18] sm:$0xff]
  %v20 = vld [vmem:[%s2] sm:$0x1]
  %v22 = vlaneseq
  %v23 = vshrl.u32 %v22, 7
  %v24 = vsub.s32 0, %v23
  %v25 = vrot.slane %v20, %v24
  %vm27 = vcmask 261120
  %v29 = vsel %vm27, %v14, 0
  %v32 = vsel %vm27, %v15, 0
  %34 = vmatprep.subr.mxu0 0.0
  %35 = vmatpush1.msra.mxu0 %v16
  %36 = vmatprep.subr.mxu0 0.0
  %37 = vmatpush1.msra.mxu0 %v17
  %38 = vmatprep.subr.mxu0 0.0
  %39 = vmatpush1.msra.mxu0 %v18
  %40 = vmatprep.subr.mxu0 0.0
  %41 = vmatpush1.msra.mxu0 %v19
  %42 = vmatprep.subr.mxu0 0.0
  %43 = vmatpush1.msra.mxu0 0.0
  %44 = vmatprep.subr.mxu0 0.0
  %45 = vmatpush1.msra.mxu0 0.0
  %46 = vmatprep.subr.mxu0 0.0
  %47 = vmatpush1.msra.mxu0 0.0
  %48 = vmatprep.subr.mxu0 0.0
  %49 = vmatpush1.msra.mxu0 0.0
  %50 = vmatprep.subr.mxu0 0.0
  %51 = vmatpush1.msra.mxu0 0.0
  %52 = vmatprep.subr.mxu0 0.0
  %53 = vmatpush1.msra.mxu0 0.0
  %54 = vmatprep.subr.mxu0 0.0
  %55 = vmatpush1.msra.mxu0 0.0
  %56 = vmatprep.subr.mxu0 0.0
  %57 = vmatpush1.msra.mxu0 0.0
  %58 = vmatprep.subr.mxu0 0.0
  %59 = vmatpush1.msra.mxu0 0.0
  %60 = vmatprep.subr.mxu0 0.0
  %61 = vmatpush1.msra.mxu0 0.0
  %62 = vmatprep.subr.mxu0 0.0
  %63 = vmatpush1.msra.mxu0 0.0
  %64 = vmatprep.subr.mxu0 0.0
  %65 = vmatpush1.msra.mxu0 0.0
  %66 = vmatprep.subr.mxu0 0.0
  %67 = vmatpush1.msra.mxu0 0.0
  %68 = vmatprep.subr.mxu0 0.0
  %69 = vmatpush1.msra.mxu0 0.0
  %70 = vmatprep.subr.mxu0 0.0
  %71 = vmatpush1.msra.mxu0 0.0
  %72 = vmatprep.subr.mxu0 0.0
  %73 = vmatpush1.msra.mxu0 0.0
  %74 = vmatprep.subr.mxu0 0.0
  %75 = vmatpush1.msra.mxu0 0.0
  %76 = vmatprep.subr.mxu0 0.0
  %77 = vmatpush1.msra.mxu0 0.0
  %78 = vmatprep.subr.mxu0 0.0
  %79 = vmatpush1.msra.mxu0 0.0
  %80 = vmatprep.subr.mxu0 0.0
  %81 = vmatpush1.msra.mxu0 0.0
  %82 = vmatprep.subr.mxu0 0.0
  %83 = vmatpush1.msra.mxu0 0.0
  %84 = vmatprep.subr.mxu0 0.0
  %85 = vmatpush1.msra.mxu0 0.0
  %86 = vmatprep.subr.mxu0 0.0
  %87 = vmatpush1.msra.mxu0 0.0
  %88 = vmatprep.subr.mxu0 0.0
  %89 = vmatpush1.msra.mxu0 0.0
  %90 = vmatprep.subr.mxu0 0.0
  %91 = vmatpush1.msra.mxu0 0.0
  %92 = vmatprep.subr.mxu0 0.0
  %93 = vmatpush1.msra.mxu0 0.0
  %94 = vmatprep.subr.mxu0 0.0
  %95 = vmatpush1.msra.mxu0 0.0
  %96 = vmatprep.subr.mxu0 0.0
  %97 = vmatpush1.msra.mxu0 0.0
  %98 = vmatprep.mubr.f32.mxu0 0.0
  %99 = vmatmul.mubr.f32.gmra.mrb[0].mxu0 %v29
  %v100 = vpop.f32.mrb[0].mxu0
  %v101 = vadd.f32 %v25, %v100
  %v102 = vpop.f32.mrb[0].mxu0
  %103 = vmatprep.mubr.f32.mxu0 0.0
  %104 = vmatmul.mubr.f32.gmra.mrb[0].mxu0 %v32
  %v105 = vpop.f32.mrb[0].mxu0
  %v106 = vadd.f32 %v25, %v105
  %v107 = vpop.f32.mrb[0].mxu0
  %108 = vdwg.mxu0
  %109 = vst [vmem:[%s3] sm:$0xff] %v101
  %110 = vst [vmem:[%s3 + $0x8] sm:$0xff] %v106
  // Predicated region
  $region14: #{ctc_head_forward.3} parent=0 // pred_check
    _
  $region15: #{ctc_head_forward.3} parent=0 // pred_check_branch
    %112 = sbr.rel (0) target = $region17
  $region16: #{ctc_head_forward.3} parent=0 // pred_region
    _
  $region17: #{ctc_head_forward.3} parent=0 // pred_fallthru
    _
  // Predicated region
  $region18: #{ctc_head_forward.3} parent=0 // pred_check
    _
  $region19: #{ctc_head_forward.3} parent=0 // pred_check_branch
    %114 = sbr.rel (0) target = $region21
  $region20: #{ctc_head_forward.3} parent=0 // pred_region
    _
  $region21: #{ctc_head_forward.3} parent=0 // pred_fallthru
    _

</llo_original>
